<compile_context>
chip_gen: v7x
topology: tpu7x:2x2x1
jax: 0.10.0
libtpu: 0.0.40
codegen_flags: <defaults>
</compile_context>

<pallas_src>
import functools

import jax
import jax.numpy as jnp
from jax.experimental import pallas as pl
from jax.experimental.pallas import tpu as pltpu


# ----------------------------------------------------------------------------
# Fused kernel (register-resident, no VMEM scratch)
# ----------------------------------------------------------------------------
def _fused_cnn_kernel(*refs, L, conv_ks, n_dense, use_bf16):
    """Whole CNN forward in one kernel invocation (one batch tile).

    refs layout (positional):
      inputs : x (TB, L, C_in),
               (conv_w (K*C_in, C_out), conv_b (1, C_out)) * n_conv,
               (dense_w (D_in, D_out), dense_b (1, D_out)) * n_dense,
               out_w (D_last, out_ch), out_b (1, out_ch)
      outputs: o (TB, out_ch)
    """
    n_conv = len(conv_ks)
    n_in = 1 + 2 * n_conv + 2 * n_dense + 2
    in_refs = refs[:n_in]
    o_ref = refs[n_in]

    x_ref = in_refs[0]
    conv_wb = [(in_refs[1 + 2 * i], in_refs[2 + 2 * i]) for i in range(n_conv)]
    off = 1 + 2 * n_conv
    dense_wb = [(in_refs[off + 2 * i], in_refs[off + 1 + 2 * i])
                for i in range(n_dense)]
    wo_ref = in_refs[off + 2 * n_dense]
    bo_ref = in_refs[off + 2 * n_dense + 1]

    def mxu(a, w_ref):
        w = w_ref[...]
        if use_bf16:                      # v6e/v7x MXU-bound sizes only
            a = a.astype(jnp.bfloat16)
            w = w.astype(jnp.bfloat16)
        return jnp.dot(a, w, preferred_element_type=jnp.float32)

    h = x_ref[...].astype(jnp.float32)    # (TB, L, C_in)
    tb = h.shape[0]

    # ---- conv stack: in-register im2col, one MXU matmul per layer ----------
    for i, K in enumerate(conv_ks):
        pad = K // 2                       # "same" padding (K odd)
        c_in = h.shape[2]
        w_ref, b_ref = conv_wb[i]
        c_out = w_ref.shape[1]

        if pad > 0:
            zpad = jnp.zeros((tb, pad, c_in), jnp.float32)
            hpad = jnp.concatenate([zpad, h, zpad], axis=1)   # (TB, L+2p, C_in)
        else:
            hpad = h

        if K > 1:
            # tap k occupies lane block [k*c_in, (k+1)*c_in); static unroll.
            taps = [hpad[:, k:k + L, :] for k in range(K)]
            a = jnp.concatenate(taps, axis=-1)                # (TB, L, K*C_in)
        else:
            a = hpad

        a = a.reshape(tb * L, K * c_in)                       # leading-dim merge
        y = jnp.maximum(mxu(a, w_ref) + b_ref[...], 0.0)      # bias+ReLU in f32
        h = y.reshape(tb, L, c_out)                           # leading-dim split

    # ---- flatten in (l, c) order, register-only -----------------------------
    # PyTorch flattens (B, C, L) channel-major (c*L + l); the first dense
    # weight's rows were permuted in the wrapper so this position-major
    # (l*C + c) lane-dense operand is mathematically identical.
    c_last = h.shape[2]
    z = jnp.concatenate([h[:, l:l + 1, :] for l in range(L)], axis=-1)
    z = z.reshape(tb, L * c_last)                             # (TB, L*C), lane-dense

    # ---- dense stack + output layer -----------------------------------------
    for w_ref, b_ref in dense_wb:
        z = jnp.maximum(mxu(z, w_ref) + b_ref[...], 0.0)

    o_ref[...] = (mxu(z, wo_ref) + bo_ref[...]).astype(o_ref.dtype)


# ----------------------------------------------------------------------------
# Wrapper: one pallas_call, batch grid, broadcast weights
# ----------------------------------------------------------------------------
def cnn_forward(x_ncl, params, *, batch_tile=None, use_bf16_matmul=False):
    """x_ncl: (B, C_in, L) — same layout as the PyTorch module input."""
    B, c_in0, L = x_ncl.shape
    convs = params["convs"]      # [(w_im2col (K*Cin, Cout), b (1, Cout), K), ...]
    denses = params["denses"]    # [(w (Din, Dout), b (1, Dout)), ...]
    wo, bo = params["out"]

    conv_ks = tuple(K for (_, _, K) in convs)
    for K in conv_ks:
        # padding = K // 2 preserves the length (and thus the flatten size
        # conv_out_channels[-1] * seq_length) only for odd kernel sizes.
        assert K % 2 == 1, "even Conv1d kernel sizes change the output length"

    # NCL -> NLC once, so each conv layer is one (TB*L, K*C_in) @ (K*C_in, C_out)
    # slab matmul inside the kernel.
    x_nlc = jnp.transpose(x_ncl, (0, 2, 1)).astype(jnp.float32)

    # Batch tile: group batch rows per matmul (raises M toward the MXU tile);
    # grid only splits once a tile is "full".
    tb = batch_tile if batch_tile is not None else 128
    tb = max(1, min(tb, B))
    grid = (pl.cdiv(B, tb),)

    def bcast_spec(arr):        # weights/biases: same block for every grid step
        return pl.BlockSpec(arr.shape, lambda b: (0, 0))

    weights = []
    in_specs = [pl.BlockSpec((tb, L, c_in0), lambda b: (b, 0, 0))]
    for (w, b, K) in convs:
        weights += [w, b]
        in_specs += [bcast_spec(w), bcast_spec(b)]
    for (w, b) in denses:
        weights += [w, b]
        in_specs += [bcast_spec(w), bcast_spec(b)]
    weights += [wo, bo]
    in_specs += [bcast_spec(wo), bcast_spec(bo)]

    out_ch = wo.shape[1]
    out_specs = pl.BlockSpec((tb, out_ch), lambda b: (b, 0))

    # Cost estimate: matmul flops + HBM traffic (x, params, output).
    flops = 0
    c = c_in0
    for (w, _, K) in convs:
        flops += 2 * (B * L) * (K * c) * int(w.shape[1])
        c = int(w.shape[1])
    d = L * c
    for (w, _) in denses:
        flops += 2 * B * d * int(w.shape[1])
        d = int(w.shape[1])
    flops += 2 * B * d * out_ch
    param_bytes = sum(int(a.size) * a.dtype.itemsize for a in weights)
    bytes_accessed = int(x_nlc.size) * 4 + param_bytes + B * out_ch * 4
    cost = pl.CostEstimate(flops=int(flops), transcendentals=0,
                           bytes_accessed=int(bytes_accessed))

    # Per-block working set (x tile + resident params + out tile), with
    # headroom for double-buffering and register spill slabs.
    block_bytes = param_bytes + tb * L * c_in0 * 4 + tb * out_ch * 4
    vmem_limit = int(min(100 << 20, max(16 << 20, 8 * block_bytes)))

    kern = functools.partial(_fused_cnn_kernel, L=L, conv_ks=conv_ks,
                             n_dense=len(denses), use_bf16=use_bf16_matmul)
    return pl.pallas_call(
        kern,
        out_shape=jax.ShapeDtypeStruct((B, out_ch), jnp.float32),
        grid=grid,
        in_specs=in_specs,
        out_specs=out_specs,
        compiler_params=pltpu.CompilerParams(
            dimension_semantics=("parallel",),
            vmem_limit_bytes=vmem_limit),
        cost_estimate=cost,
    )(x_nlc, *weights)


# ----------------------------------------------------------------------------
# Pure-JAX reference (correctness check only)
# ----------------------------------------------------------------------------
def reference_forward(x_ncl, raw):
    h = x_ncl
    for (w_oik, b_o, K) in raw["convs"]:
        pad = K // 2
        h = jax.lax.conv_general_dilated(
            h, w_oik, window_strides=(1,), padding=[(pad, pad)],
            dimension_numbers=("NCH", "OIH", "NCH"))
        h = jax.nn.relu(h + b_o[None, :, None])
    h = h.reshape(h.shape[0], -1)
    for (w_oi, b_o) in raw["denses"]:
        h = jax.nn.relu(h @ w_oi.T + b_o)
    w_oi, b_o = raw["out"]
    return h @ w_oi.T + b_o


# ----------------------------------------------------------------------------
# Deterministic parameter construction (PyTorch-shaped, then repacked)
# ----------------------------------------------------------------------------
def make_params(key, input_channels, output_channels, conv_out_channels,
                conv_kernel_sizes, dense_units, seq_length):
    raw = {"convs": [], "denses": [], "out": None}
    kp = {"convs": [], "denses": [], "out": None}

    c_in = input_channels
    for c_out, K in zip(conv_out_channels, conv_kernel_sizes):
        key, k1, k2 = jax.random.split(key, 3)
        bound = 1.0 / jnp.sqrt(c_in * K)
        w = jax.random.uniform(k1, (c_out, c_in, K), jnp.float32, -bound, bound)
        b = jax.random.uniform(k2, (c_out,), jnp.float32, -bound, bound)
        raw["convs"].append((w, b, K))
        # repack: (C_out, C_in, K) -> (K, C_in, C_out) -> (K*C_in, C_out)
        w_im2col = jnp.transpose(w, (2, 1, 0)).reshape(K * c_in, c_out)
        kp["convs"].append((w_im2col, b[None, :], K))
        c_in = c_out

    c_last = conv_out_channels[-1]
    d_in = c_last * seq_length
    for i, d_out in enumerate(dense_units):
        key, k1, k2 = jax.random.split(key, 3)
        bound = 1.0 / jnp.sqrt(d_in)
        w = jax.random.uniform(k1, (d_out, d_in), jnp.float32, -bound, bound)
        b = jax.random.uniform(k2, (d_out,), jnp.float32, -bound, bound)
        raw["denses"].append((w, b))
        if i == 0:
            # PyTorch flattens (B, C, L) channel-major (index c*L + l); the
            # kernel flattens position-major (index l*C + c) -> permute the
            # weight's input columns accordingly, then transpose to (D_in, D_out).
            w_k = (w.reshape(d_out, c_last, seq_length)
                    .transpose(0, 2, 1)
                    .reshape(d_out, d_in)).T
        else:
            w_k = w.T
        kp["denses"].append((w_k, b[None, :]))
        d_in = d_out

    key, k1, k2 = jax.random.split(key, 3)
    bound = 1.0 / jnp.sqrt(d_in)
    w = jax.random.uniform(k1, (output_channels, d_in), jnp.float32, -bound, bound)
    b = jax.random.uniform(k2, (output_channels,), jnp.float32, -bound, bound)
    raw["out"] = (w, b)
    kp["out"] = (w.T, b[None, :])
    return raw, kp


# ----------------------------------------------------------------------------
if __name__ == "__main__":
    # Module config (odd kernel sizes so int(k/2) padding preserves seq_length,
    # matching the flatten size `conv_out_channels[-1] * seq_length`).
    B = 2
    input_channels = 4
    output_channels = 4
    conv_out_channels = [8, 8]
    conv_kernel_sizes = [3, 5]
    dense_units = [32, 16]
    seq_length = 16

    key = jax.random.PRNGKey(0)
    key, kx = jax.random.split(key)
    x = jax.random.normal(kx, (B, input_channels, seq_length), jnp.float32)

    raw, kparams = make_params(key, input_channels, output_channels,
                               conv_out_channels, conv_kernel_sizes,
                               dense_units, seq_length)

    out = cnn_forward(x, kparams)
    out = jax.block_until_ready(out)

    ref = reference_forward(x, raw)
    assert out.shape == (B, output_channels)
    assert jnp.allclose(out, ref, atol=1e-4, rtol=1e-4), "mismatch vs reference"

    print("KERNEL_OK")
</pallas_src>

<mosaic_0001>
module attributes {stable_mosaic.version = 11 : i64} {
  func.func @_fused_cnn_kernel(%arg0: i32, %arg1: memref<2x16x4xf32, #tpu.memory_space<vmem>>, %arg2: memref<12x8xf32, #tpu.memory_space<vmem>>, %arg3: memref<1x8xf32, #tpu.memory_space<vmem>>, %arg4: memref<40x8xf32, #tpu.memory_space<vmem>>, %arg5: memref<1x8xf32, #tpu.memory_space<vmem>>, %arg6: memref<128x32xf32, #tpu.memory_space<vmem>>, %arg7: memref<1x32xf32, #tpu.memory_space<vmem>>, %arg8: memref<32x16xf32, #tpu.memory_space<vmem>>, %arg9: memref<1x16xf32, #tpu.memory_space<vmem>>, %arg10: memref<16x4xf32, #tpu.memory_space<vmem>>, %arg11: memref<1x4xf32, #tpu.memory_space<vmem>>, %arg12: memref<2x4xf32, #tpu.memory_space<vmem>>) attributes {dimension_semantics = [#tpu.dimension_semantics<parallel>], iteration_bounds = array<i64: 1>, scalar_prefetch = 0 : i64, scratch_operands = 0 : i64, tpu.core_type = #tpu.core_type<tc>, window_params = [{transform_indices = @transform_0, window_bounds = array<i64: 2, 16, 4>}, {pipeline_mode = #tpu.pipeline_mode<synchronous>, transform_indices = @transform_1, window_bounds = array<i64: 12, 8>}, {pipeline_mode = #tpu.pipeline_mode<synchronous>, transform_indices = @transform_2, window_bounds = array<i64: 1, 8>}, {pipeline_mode = #tpu.pipeline_mode<synchronous>, transform_indices = @transform_3, window_bounds = array<i64: 40, 8>}, {pipeline_mode = #tpu.pipeline_mode<synchronous>, transform_indices = @transform_4, window_bounds = array<i64: 1, 8>}, {pipeline_mode = #tpu.pipeline_mode<synchronous>, transform_indices = @transform_5, window_bounds = array<i64: 128, 32>}, {pipeline_mode = #tpu.pipeline_mode<synchronous>, transform_indices = @transform_6, window_bounds = array<i64: 1, 32>}, {pipeline_mode = #tpu.pipeline_mode<synchronous>, transform_indices = @transform_7, window_bounds = array<i64: 32, 16>}, {pipeline_mode = #tpu.pipeline_mode<synchronous>, transform_indices = @transform_8, window_bounds = array<i64: 1, 16>}, {pipeline_mode = #tpu.pipeline_mode<synchronous>, transform_indices = @transform_9, window_bounds = array<i64: 16, 4>}, {pipeline_mode = #tpu.pipeline_mode<synchronous>, transform_indices = @transform_10, window_bounds = array<i64: 1, 4>}, {transform_indices = @transform_11, window_bounds = array<i64: 2, 4>}]} {
    %c0 = arith.constant 0 : index
    %c0_0 = arith.constant 0 : index
    %c0_1 = arith.constant 0 : index
    %0 = vector.load %arg1[%c0, %c0_0, %c0_1] : memref<2x16x4xf32, #tpu.memory_space<vmem>>, vector<2x16x4xf32>
    %cst = arith.constant 0.000000e+00 : f32
    %1 = vector.broadcast %cst : f32 to vector<2x1x4xf32>
    %2 = tpu.concatenate %1, %0, %1 in 1 : vector<2x1x4xf32>, vector<2x16x4xf32>, vector<2x1x4xf32> -> vector<2x18x4xf32>
    %3 = vector.extract_strided_slice %2 {offsets = [0, 0, 0], sizes = [2, 16, 4], strides = [1, 1, 1]} : vector<2x18x4xf32> to vector<2x16x4xf32>
    %4 = vector.extract_strided_slice %2 {offsets = [0, 1, 0], sizes = [2, 16, 4], strides = [1, 1, 1]} : vector<2x18x4xf32> to vector<2x16x4xf32>
    %5 = vector.extract_strided_slice %2 {offsets = [0, 2, 0], sizes = [2, 16, 4], strides = [1, 1, 1]} : vector<2x18x4xf32> to vector<2x16x4xf32>
    %6 = tpu.concatenate %3, %4, %5 in 2 : vector<2x16x4xf32>, vector<2x16x4xf32>, vector<2x16x4xf32> -> vector<2x16x12xf32>
    %7 = vector.shape_cast %6 : vector<2x16x12xf32> to vector<32x12xf32>
    %c0_2 = arith.constant 0 : index
    %c0_3 = arith.constant 0 : index
    %8 = vector.load %arg2[%c0_2, %c0_3] : memref<12x8xf32, #tpu.memory_space<vmem>>, vector<12x8xf32>
    %cst_4 = arith.constant dense<0.000000e+00> : vector<32x8xf32>
    %9 = tpu.matmul %7, %8, %cst_4 {dimension_numbers = #tpu.dot_dimension_numbers<[1], [0], [0], [1], [0, 0, 1, 1], [], []>} : vector<32x12xf32>, vector<12x8xf32>, vector<32x8xf32> -> vector<32x8xf32>
    %c0_5 = arith.constant 0 : index
    %c0_6 = arith.constant 0 : index
    %10 = vector.load %arg3[%c0_5, %c0_6] : memref<1x8xf32, #tpu.memory_space<vmem>>, vector<1x8xf32>
    %11 = vector.broadcast %10 : vector<1x8xf32> to vector<32x8xf32>
    %12 = arith.addf %9, %11 : vector<32x8xf32>
    %cst_7 = arith.constant 0.000000e+00 : f32
    %13 = vector.broadcast %cst_7 : f32 to vector<32x8xf32>
    %14 = arith.maximumf %12, %13 : vector<32x8xf32>
    %15 = vector.shape_cast %14 : vector<32x8xf32> to vector<2x16x8xf32>
    %cst_8 = arith.constant 0.000000e+00 : f32
    %16 = vector.broadcast %cst_8 : f32 to vector<2x2x8xf32>
    %17 = tpu.concatenate %16, %15, %16 in 1 : vector<2x2x8xf32>, vector<2x16x8xf32>, vector<2x2x8xf32> -> vector<2x20x8xf32>
    %18 = vector.extract_strided_slice %17 {offsets = [0, 0, 0], sizes = [2, 16, 8], strides = [1, 1, 1]} : vector<2x20x8xf32> to vector<2x16x8xf32>
    %19 = vector.extract_strided_slice %17 {offsets = [0, 1, 0], sizes = [2, 16, 8], strides = [1, 1, 1]} : vector<2x20x8xf32> to vector<2x16x8xf32>
    %20 = vector.extract_strided_slice %17 {offsets = [0, 2, 0], sizes = [2, 16, 8], strides = [1, 1, 1]} : vector<2x20x8xf32> to vector<2x16x8xf32>
    %21 = vector.extract_strided_slice %17 {offsets = [0, 3, 0], sizes = [2, 16, 8], strides = [1, 1, 1]} : vector<2x20x8xf32> to vector<2x16x8xf32>
    %22 = vector.extract_strided_slice %17 {offsets = [0, 4, 0], sizes = [2, 16, 8], strides = [1, 1, 1]} : vector<2x20x8xf32> to vector<2x16x8xf32>
    %23 = tpu.concatenate %18, %19, %20, %21, %22 in 2 : vector<2x16x8xf32>, vector<2x16x8xf32>, vector<2x16x8xf32>, vector<2x16x8xf32>, vector<2x16x8xf32> -> vector<2x16x40xf32>
    %24 = vector.shape_cast %23 : vector<2x16x40xf32> to vector<32x40xf32>
    %c0_9 = arith.constant 0 : index
    %c0_10 = arith.constant 0 : index
    %25 = vector.load %arg4[%c0_9, %c0_10] : memref<40x8xf32, #tpu.memory_space<vmem>>, vector<40x8xf32>
    %cst_11 = arith.constant dense<0.000000e+00> : vector<32x8xf32>
    %26 = tpu.matmul %24, %25, %cst_11 {dimension_numbers = #tpu.dot_dimension_numbers<[1], [0], [0], [1], [0, 0, 1, 1], [], []>} : vector<32x40xf32>, vector<40x8xf32>, vector<32x8xf32> -> vector<32x8xf32>
    %c0_12 = arith.constant 0 : index
    %c0_13 = arith.constant 0 : index
    %27 = vector.load %arg5[%c0_12, %c0_13] : memref<1x8xf32, #tpu.memory_space<vmem>>, vector<1x8xf32>
    %28 = vector.broadcast %27 : vector<1x8xf32> to vector<32x8xf32>
    %29 = arith.addf %26, %28 : vector<32x8xf32>
    %cst_14 = arith.constant 0.000000e+00 : f32
    %30 = vector.broadcast %cst_14 : f32 to vector<32x8xf32>
    %31 = arith.maximumf %29, %30 : vector<32x8xf32>
    %32 = vector.shape_cast %31 : vector<32x8xf32> to vector<2x16x8xf32>
    %33 = vector.extract_strided_slice %32 {offsets = [0, 0, 0], sizes = [2, 1, 8], strides = [1, 1, 1]} : vector<2x16x8xf32> to vector<2x1x8xf32>
    %34 = vector.extract_strided_slice %32 {offsets = [0, 1, 0], sizes = [2, 1, 8], strides = [1, 1, 1]} : vector<2x16x8xf32> to vector<2x1x8xf32>
    %35 = vector.extract_strided_slice %32 {offsets = [0, 2, 0], sizes = [2, 1, 8], strides = [1, 1, 1]} : vector<2x16x8xf32> to vector<2x1x8xf32>
    %36 = vector.extract_strided_slice %32 {offsets = [0, 3, 0], sizes = [2, 1, 8], strides = [1, 1, 1]} : vector<2x16x8xf32> to vector<2x1x8xf32>
    %37 = vector.extract_strided_slice %32 {offsets = [0, 4, 0], sizes = [2, 1, 8], strides = [1, 1, 1]} : vector<2x16x8xf32> to vector<2x1x8xf32>
    %38 = vector.extract_strided_slice %32 {offsets = [0, 5, 0], sizes = [2, 1, 8], strides = [1, 1, 1]} : vector<2x16x8xf32> to vector<2x1x8xf32>
    %39 = vector.extract_strided_slice %32 {offsets = [0, 6, 0], sizes = [2, 1, 8], strides = [1, 1, 1]} : vector<2x16x8xf32> to vector<2x1x8xf32>
    %40 = vector.extract_strided_slice %32 {offsets = [0, 7, 0], sizes = [2, 1, 8], strides = [1, 1, 1]} : vector<2x16x8xf32> to vector<2x1x8xf32>
    %41 = vector.extract_strided_slice %32 {offsets = [0, 8, 0], sizes = [2, 1, 8], strides = [1, 1, 1]} : vector<2x16x8xf32> to vector<2x1x8xf32>
    %42 = vector.extract_strided_slice %32 {offsets = [0, 9, 0], sizes = [2, 1, 8], strides = [1, 1, 1]} : vector<2x16x8xf32> to vector<2x1x8xf32>
    %43 = vector.extract_strided_slice %32 {offsets = [0, 10, 0], sizes = [2, 1, 8], strides = [1, 1, 1]} : vector<2x16x8xf32> to vector<2x1x8xf32>
    %44 = vector.extract_strided_slice %32 {offsets = [0, 11, 0], sizes = [2, 1, 8], strides = [1, 1, 1]} : vector<2x16x8xf32> to vector<2x1x8xf32>
    %45 = vector.extract_strided_slice %32 {offsets = [0, 12, 0], sizes = [2, 1, 8], strides = [1, 1, 1]} : vector<2x16x8xf32> to vector<2x1x8xf32>
    %46 = vector.extract_strided_slice %32 {offsets = [0, 13, 0], sizes = [2, 1, 8], strides = [1, 1, 1]} : vector<2x16x8xf32> to vector<2x1x8xf32>
    %47 = vector.extract_strided_slice %32 {offsets = [0, 14, 0], sizes = [2, 1, 8], strides = [1, 1, 1]} : vector<2x16x8xf32> to vector<2x1x8xf32>
    %48 = vector.extract_strided_slice %32 {offsets = [0, 15, 0], sizes = [2, 1, 8], strides = [1, 1, 1]} : vector<2x16x8xf32> to vector<2x1x8xf32>
    %49 = tpu.concatenate %33, %34, %35, %36, %37, %38, %39, %40, %41, %42, %43, %44, %45, %46, %47, %48 in 2 : vector<2x1x8xf32>, vector<2x1x8xf32>, vector<2x1x8xf32>, vector<2x1x8xf32>, vector<2x1x8xf32>, vector<2x1x8xf32>, vector<2x1x8xf32>, vector<2x1x8xf32>, vector<2x1x8xf32>, vector<2x1x8xf32>, vector<2x1x8xf32>, vector<2x1x8xf32>, vector<2x1x8xf32>, vector<2x1x8xf32>, vector<2x1x8xf32>, vector<2x1x8xf32> -> vector<2x1x128xf32>
    %50 = vector.shape_cast %49 : vector<2x1x128xf32> to vector<2x128xf32>
    %c0_15 = arith.constant 0 : index
    %c0_16 = arith.constant 0 : index
    %51 = vector.load %arg6[%c0_15, %c0_16] : memref<128x32xf32, #tpu.memory_space<vmem>>, vector<128x32xf32>
    %cst_17 = arith.constant dense<0.000000e+00> : vector<2x32xf32>
    %52 = tpu.matmul %50, %51, %cst_17 {dimension_numbers = #tpu.dot_dimension_numbers<[1], [0], [0], [1], [0, 0, 1, 1], [], []>} : vector<2x128xf32>, vector<128x32xf32>, vector<2x32xf32> -> vector<2x32xf32>
    %c0_18 = arith.constant 0 : index
    %c0_19 = arith.constant 0 : index
    %53 = vector.load %arg7[%c0_18, %c0_19] : memref<1x32xf32, #tpu.memory_space<vmem>>, vector<1x32xf32>
    %54 = vector.broadcast %53 : vector<1x32xf32> to vector<2x32xf32>
    %55 = arith.addf %52, %54 : vector<2x32xf32>
    %cst_20 = arith.constant 0.000000e+00 : f32
    %56 = vector.broadcast %cst_20 : f32 to vector<2x32xf32>
    %57 = arith.maximumf %55, %56 : vector<2x32xf32>
    %c0_21 = arith.constant 0 : index
    %c0_22 = arith.constant 0 : index
    %58 = vector.load %arg8[%c0_21, %c0_22] : memref<32x16xf32, #tpu.memory_space<vmem>>, vector<32x16xf32>
    %cst_23 = arith.constant dense<0.000000e+00> : vector<2x16xf32>
    %59 = tpu.matmul %57, %58, %cst_23 {dimension_numbers = #tpu.dot_dimension_numbers<[1], [0], [0], [1], [0, 0, 1, 1], [], []>} : vector<2x32xf32>, vector<32x16xf32>, vector<2x16xf32> -> vector<2x16xf32>
    %c0_24 = arith.constant 0 : index
    %c0_25 = arith.constant 0 : index
    %60 = vector.load %arg9[%c0_24, %c0_25] : memref<1x16xf32, #tpu.memory_space<vmem>>, vector<1x16xf32>
    %61 = vector.broadcast %60 : vector<1x16xf32> to vector<2x16xf32>
    %62 = arith.addf %59, %61 : vector<2x16xf32>
    %cst_26 = arith.constant 0.000000e+00 : f32
    %63 = vector.broadcast %cst_26 : f32 to vector<2x16xf32>
    %64 = arith.maximumf %62, %63 : vector<2x16xf32>
    %c0_27 = arith.constant 0 : index
    %c0_28 = arith.constant 0 : index
    %65 = vector.load %arg10[%c0_27, %c0_28] : memref<16x4xf32, #tpu.memory_space<vmem>>, vector<16x4xf32>
    %cst_29 = arith.constant dense<0.000000e+00> : vector<2x4xf32>
    %66 = tpu.matmul %64, %65, %cst_29 {dimension_numbers = #tpu.dot_dimension_numbers<[1], [0], [0], [1], [0, 0, 1, 1], [], []>} : vector<2x16xf32>, vector<16x4xf32>, vector<2x4xf32> -> vector<2x4xf32>
    %c0_30 = arith.constant 0 : index
    %c0_31 = arith.constant 0 : index
    %67 = vector.load %arg11[%c0_30, %c0_31] : memref<1x4xf32, #tpu.memory_space<vmem>>, vector<1x4xf32>
    %68 = vector.broadcast %67 : vector<1x4xf32> to vector<2x4xf32>
    %69 = arith.addf %66, %68 : vector<2x4xf32>
    %c0_32 = arith.constant 0 : index
    %c0_33 = arith.constant 0 : index
    %70 = vector.load %arg12[%c0_32, %c0_33] : memref<2x4xf32, #tpu.memory_space<vmem>>, vector<2x4xf32>
    tpu.vector_store %arg12[%c0_32, %c0_33], %69 {strides = array<i32>} : memref<2x4xf32, #tpu.memory_space<vmem>>, vector<2x4xf32>,
    return
  }
  func.func @transform_0(%arg0: i32) -> (i32, i32, i32) {
    %c0_i32 = arith.constant 0 : i32
    %c0_i32_0 = arith.constant 0 : i32
    %c0_i32_1 = arith.constant 0 : i32
    return %arg0, %c0_i32, %c0_i32_0 : i32, i32, i32
  }
  func.func @transform_1(%arg0: i32) -> (i32, i32) {
    %c0_i32 = arith.constant 0 : i32
    %c0_i32_0 = arith.constant 0 : i32
    %c0_i32_1 = arith.constant 0 : i32
    return %c0_i32, %c0_i32_0 : i32, i32
  }
  func.func @transform_2(%arg0: i32) -> (i32, i32) {
    %c0_i32 = arith.constant 0 : i32
    %c0_i32_0 = arith.constant 0 : i32
    %c0_i32_1 = arith.constant 0 : i32
    return %c0_i32, %c0_i32_0 : i32, i32
  }
  func.func @transform_3(%arg0: i32) -> (i32, i32) {
    %c0_i32 = arith.constant 0 : i32
    %c0_i32_0 = arith.constant 0 : i32
    %c0_i32_1 = arith.constant 0 : i32
    return %c0_i32, %c0_i32_0 : i32, i32
  }
  func.func @transform_4(%arg0: i32) -> (i32, i32) {
    %c0_i32 = arith.constant 0 : i32
    %c0_i32_0 = arith.constant 0 : i32
    %c0_i32_1 = arith.constant 0 : i32
    return %c0_i32, %c0_i32_0 : i32, i32
  }
  func.func @transform_5(%arg0: i32) -> (i32, i32) {
    %c0_i32 = arith.constant 0 : i32
    %c0_i32_0 = arith.constant 0 : i32
    %c0_i32_1 = arith.constant 0 : i32
    return %c0_i32, %c0_i32_0 : i32, i32
  }
  func.func @transform_6(%arg0: i32) -> (i32, i32) {
    %c0_i32 = arith.constant 0 : i32
    %c0_i32_0 = arith.constant 0 : i32
    %c0_i32_1 = arith.constant 0 : i32
    return %c0_i32, %c0_i32_0 : i32, i32
  }
  func.func @transform_7(%arg0: i32) -> (i32, i32) {
    %c0_i32 = arith.constant 0 : i32
    %c0_i32_0 = arith.constant 0 : i32
    %c0_i32_1 = arith.constant 0 : i32
    return %c0_i32, %c0_i32_0 : i32, i32
  }
  func.func @transform_8(%arg0: i32) -> (i32, i32) {
    %c0_i32 = arith.constant 0 : i32
    %c0_i32_0 = arith.constant 0 : i32
    %c0_i32_1 = arith.constant 0 : i32
    return %c0_i32, %c0_i32_0 : i32, i32
  }
  func.func @transform_9(%arg0: i32) -> (i32, i32) {
    %c0_i32 = arith.constant 0 : i32
    %c0_i32_0 = arith.constant 0 : i32
    %c0_i32_1 = arith.constant 0 : i32
    return %c0_i32, %c0_i32_0 : i32, i32
  }
  func.func @transform_10(%arg0: i32) -> (i32, i32) {
    %c0_i32 = arith.constant 0 : i32
    %c0_i32_0 = arith.constant 0 : i32
    %c0_i32_1 = arith.constant 0 : i32
    return %c0_i32, %c0_i32_0 : i32, i32
  }
  func.func @transform_11(%arg0: i32) -> (i32, i32) {
    %c0_i32 = arith.constant 0 : i32
    %c0_i32_0 = arith.constant 0 : i32
    return %arg0, %c0_i32 : i32, i32
  }
}

</mosaic_0001>

<llo_original>
// kernel: tpu_custom_call.1
$region0: #{tpu_custom_call.1}
  #allocation0 [shape = 'u32[]', space=smem, size = 0x4, offset = 0x4, fixed_abs, tag = 'smem constant byte address 0x4 - core index']
  #allocation1 [shape = 'u32[144,128]{1,0:T(1,128)}', space=vmem, size = 0x12000, scoped, tag = 'internal scratch']
  %s0 = inlined_call_operand.vmem [shape: f32[2,16,4], index: 0, kind: input, shape index: {}]
  %s1 = inlined_call_operand.vmem [shape: f32[12,8], index: 1, kind: input, shape index: {}]
  %s2 = inlined_call_operand.vmem [shape: f32[1,8], index: 2, kind: input, shape index: {}]
  %s3 = inlined_call_operand.vmem [shape: f32[40,8], index: 3, kind: input, shape index: {}]
  %s4 = inlined_call_operand.vmem [shape: f32[1,8], index: 4, kind: input, shape index: {}]
  %s5 = inlined_call_operand.vmem [shape: f32[128,32], index: 5, kind: input, shape index: {}]
  %s6 = inlined_call_operand.vmem [shape: f32[1,32], index: 6, kind: input, shape index: {}]
  %s7 = inlined_call_operand.vmem [shape: f32[32,16], index: 7, kind: input, shape index: {}]
  %s8 = inlined_call_operand.vmem [shape: f32[1,16], index: 8, kind: input, shape index: {}]
  %s9 = inlined_call_operand.vmem [shape: f32[16,4], index: 9, kind: input, shape index: {}]
  %s10 = inlined_call_operand.vmem [shape: f32[1,4], index: 10, kind: input, shape index: {}]
  %s11 = inlined_call_operand.hbm [shape: f32[2,4], index: 11, kind: output, shape index: {}]
  %s12 = sld [smem:[#allocation0]]
  $region54: #{tpu_custom_call.1} parent=0
    _
  %s14 = ssub.s32 1, %s12
  %s15 = scalar_select 0, %s14, %s12
  $region1: #{tpu_custom_call.1} parent=0
    #allocation2 [shape = 'u8[1024]{0}', space=vmem, size = 0x400, scoped, tag = 'output window, operand 0, single buffered']
    #allocation3 [shape = 's32[1]{0}', space=sflag, size = 0x4, scoped, tag = 'scoped memory for tpu_custom_call.1']
    %16 = vsyncpa [#allocation3], 0
    // Predicated region
    $region2: #{tpu_custom_call.1} parent=1 // pred_check
      _
    $region3: #{tpu_custom_call.1} parent=1 // pred_check_branch
      %18 = sbr.rel (0) target = $region5
    $region4: #{tpu_custom_call.1} parent=1 // pred_region
      _
    $region5: #{tpu_custom_call.1} parent=1 // pred_fallthru
      _
    // Predicated region
    $region6: #{tpu_custom_call.1} parent=1 // pred_check
      _
    $region7: #{tpu_custom_call.1} parent=1 // pred_check_branch
      %20 = sbr.rel (0) target = $region9
    $region8: #{tpu_custom_call.1} parent=1 // pred_region
      _
    $region9: #{tpu_custom_call.1} parent=1 // pred_fallthru
      _
    // Predicated region
    $region10: #{tpu_custom_call.1} parent=1 // pred_check
      _
    $region11: #{tpu_custom_call.1} parent=1 // pred_check_branch
      %22 = sbr.rel (0) target = $region13
    $region12: #{tpu_custom_call.1} parent=1 // pred_region
      _
    $region13: #{tpu_custom_call.1} parent=1 // pred_fallthru
      _
    // Predicated region
    $region14: #{tpu_custom_call.1} parent=1 // pred_check
      _
    $region15: #{tpu_custom_call.1} parent=1 // pred_check_branch
      %24 = sbr.rel (0) target = $region17
    $region16: #{tpu_custom_call.1} parent=1 // pred_region
      _
    $region17: #{tpu_custom_call.1} parent=1 // pred_fallthru
      _
    // Predicated region
    $region18: #{tpu_custom_call.1} parent=1 // pred_check
      _
    $region19: #{tpu_custom_call.1} parent=1 // pred_check_branch
      %26 = sbr.rel (0) target = $region21
    $region20: #{tpu_custom_call.1} parent=1 // pred_region
      _
    $region21: #{tpu_custom_call.1} parent=1 // pred_fallthru
      _
    // Predicated region
    $region22: #{tpu_custom_call.1} parent=1 // pred_check
      _
    $region23: #{tpu_custom_call.1} parent=1 // pred_check_branch
      %28 = sbr.rel (0) target = $region25
    $region24: #{tpu_custom_call.1} parent=1 // pred_region
      _
    $region25: #{tpu_custom_call.1} parent=1 // pred_fallthru
      _
    // Predicated region
    $region26: #{tpu_custom_call.1} parent=1 // pred_check
      _
    $region27: #{tpu_custom_call.1} parent=1 // pred_check_branch
      %30 = sbr.rel (0) target = $region29
    $region28: #{tpu_custom_call.1} parent=1 // pred_region
      _
    $region29: #{tpu_custom_call.1} parent=1 // pred_fallthru
      _
    // Predicated region
    $region30: #{tpu_custom_call.1} parent=1 // pred_check
      _
    $region31: #{tpu_custom_call.1} parent=1 // pred_check_branch
      %32 = sbr.rel (0) target = $region33
    $region32: #{tpu_custom_call.1} parent=1 // pred_region
      _
    $region33: #{tpu_custom_call.1} parent=1 // pred_fallthru
      _
    // Predicated region
    $region34: #{tpu_custom_call.1} parent=1 // pred_check
      _
    $region35: #{tpu_custom_call.1} parent=1 // pred_check_branch
      %34 = sbr.rel (0) target = $region37
    $region36: #{tpu_custom_call.1} parent=1 // pred_region
      _
    $region37: #{tpu_custom_call.1} parent=1 // pred_fallthru
      _
    // Predicated region
    $region38: #{tpu_custom_call.1} parent=1 // pred_check
      _
    $region39: #{tpu_custom_call.1} parent=1 // pred_check_branch
      %36 = sbr.rel (0) target = $region41
    $region40: #{tpu_custom_call.1} parent=1 // pred_region
      _
    $region41: #{tpu_custom_call.1} parent=1 // pred_fallthru
      _
    // Predicated region
    $region42: #{tpu_custom_call.1} parent=1 // pred_check
      _
    $region43: #{tpu_custom_call.1} parent=1 // pred_check_branch
      %38 = sbr.rel (0) target = $region45
    $region44: #{tpu_custom_call.1} parent=1 // pred_region
      _
    $region45: #{tpu_custom_call.1} parent=1 // pred_fallthru
      _
    %v39 = vld [vmem:[%s0] sm:$0xff]
    %v40 = vld [vmem:[%s0 + $0x8] sm:$0xff]
    %v41 = vld [vmem:[%s0 + $0x10] sm:$0xff]
    %v42 = vld [vmem:[%s0 + $0x18] sm:$0xff]
    %vm47 = vcmask 1040384
    %v48 = vrot.slane %v39, 7
    %v49 = vrot.slane %v40, 7
    %v50 = vsel %vm47, %v48, %v49
    %v51 = vrot.slane %v41, 7
    %v52 = vrot.slane %v42, 7
    %v53 = vsel %vm47, %v51, %v52
    %v60 = vsel %vm47, 0.0, %v48
    %v61 = vsel %vm47, 0.0, %v51
    %v62 = vsel %vm47, %v49, 0.0
    %v63 = vsel %vm47, %v52, 0.0
    %vm68 = vcmask 1046528
    %v69 = vrot.slane %v60, 1
    %v70 = vrot.slane %v50, 1
    %v71 = vsel %vm68, %v69, %v70
    %v72 = vrot.slane %v62, 1
    %v73 = vsel %vm68, %v70, %v72
    %v74 = vrot.slane %v61, 1
    %v75 = vrot.slane %v53, 1
    %v76 = vsel %vm68, %v74, %v75
    %v77 = vrot.slane %v63, 1
    %v78 = vsel %vm68, %v75, %v77
    %79 = vrot.lane.b32.xlu0 %v71, 4
    %v80 = vpop.permute.xlu0 %79
    %81 = vrot.lane.b32.xlu0 %v73, 4
    %v82 = vpop.permute.xlu0 %81
    %83 = vrot.lane.b32.xlu0 %v76, 4
    %v84 = vpop.permute.xlu0 %83
    %85 = vrot.lane.b32.xlu0 %v78, 4
    %v86 = vpop.permute.xlu0 %85
    %vm91 = vcmask 1045504
    %v92 = vrot.slane %v60, 2
    %v93 = vrot.slane %v50, 2
    %v94 = vsel %vm91, %v92, %v93
    %v95 = vrot.slane %v62, 2
    %v96 = vsel %vm91, %v93, %v95
    %v97 = vrot.slane %v61, 2
    %v98 = vrot.slane %v53, 2
    %v99 = vsel %vm91, %v97, %v98
    %v100 = vrot.slane %v63, 2
    %v101 = vsel %vm91, %v98, %v100
    %102 = vrot.lane.b32.xlu0 %v94, 8
    %v103 = vpop.permute.xlu0 %102
    %104 = vrot.lane.b32.xlu0 %v96, 8
    %v105 = vpop.permute.xlu0 %104
    %106 = vrot.lane.b32.xlu0 %v99, 8
    %v107 = vpop.permute.xlu0 %106
    %108 = vrot.lane.b32.xlu0 %v101, 8
    %v109 = vpop.permute.xlu0 %108
    %vm114 = vcmask 31744
    %v115 = vsel %vm114, %v60, %v80
    %v116 = vsel %vm114, %v50, %v82
    %v117 = vsel %vm114, %v61, %v84
    %v118 = vsel %vm114, %v53, %v86
    %vm119 = vcmask 64512
    %v120 = vsel %vm119, %v115, %v103
    %v121 = vsel %vm119, %v116, %v105
    %v122 = vsel %vm119, %v117, %v107
    %v123 = vsel %vm119, %v118, %v109
    %v124 = vld [vmem:[%s1] sm:$0xff]
    %v125 = vld [vmem:[%s1 + $0x8] sm:$0xf]
    %v126 = vld [vmem:[%s2] sm:$0x1]
    %v128 = vlaneseq
    %v129 = vshrl.u32 %v128, 7
    %v130 = vsub.s32 0, %v129
    %v131 = vrot.slane %v126, %v130
    %vm133 = vcmask 97280
    %v135 = vsel %vm133, %v120, 0
    %v138 = vsel %vm133, %v121, 0
    %v141 = vsel %vm133, %v122, 0
    %v144 = vsel %vm133, %v123, 0
    %vm146 = vcmask 1043456
    %v148 = vsel %vm146, %v125, 0
    %150 = vmatprep.subr.mxu0 0.0
    %151 = vmatpush1.msra.mxu0 %v124
    %152 = vmatprep.subr.mxu0 0.0
    %153 = vmatpush1.msra.mxu0 %v148
    %154 = vmatprep.subr.mxu0 0.0
    %155 = vmatpush1.msra.mxu0 0.0
    %156 = vmatprep.subr.mxu0 0.0
    %157 = vmatpush1.msra.mxu0 0.0
    %158 = vmatprep.subr.mxu0 0.0
    %159 = vmatpush1.msra.mxu0 0.0
    %160 = vmatprep.subr.mxu0 0.0
    %161 = vmatpush1.msra.mxu0 0.0
    %162 = vmatprep.subr.mxu0 0.0
    %163 = vmatpush1.msra.mxu0 0.0
    %164 = vmatprep.subr.mxu0 0.0
    %165 = vmatpush1.msra.mxu0 0.0
    %166 = vmatprep.subr.mxu0 0.0
    %167 = vmatpush1.msra.mxu0 0.0
    %168 = vmatprep.subr.mxu0 0.0
    %169 = vmatpush1.msra.mxu0 0.0
    %170 = vmatprep.subr.mxu0 0.0
    %171 = vmatpush1.msra.mxu0 0.0
    %172 = vmatprep.subr.mxu0 0.0
    %173 = vmatpush1.msra.mxu0 0.0
    %174 = vmatprep.subr.mxu0 0.0
    %175 = vmatpush1.msra.mxu0 0.0
    %176 = vmatprep.subr.mxu0 0.0
    %177 = vmatpush1.msra.mxu0 0.0
    %178 = vmatprep.subr.mxu0 0.0
    %179 = vmatpush1.msra.mxu0 0.0
    %180 = vmatprep.subr.mxu0 0.0
    %181 = vmatpush1.msra.mxu0 0.0
    %182 = vmatprep.subr.mxu0 0.0
    %183 = vmatpush1.msra.mxu0 0.0
    %184 = vmatprep.subr.mxu0 0.0
    %185 = vmatpush1.msra.mxu0 0.0
    %186 = vmatprep.subr.mxu0 0.0
    %187 = vmatpush1.msra.mxu0 0.0
    %188 = vmatprep.subr.mxu0 0.0
    %189 = vmatpush1.msra.mxu0 0.0
    %190 = vmatprep.subr.mxu0 0.0
    %191 = vmatpush1.msra.mxu0 0.0
    %192 = vmatprep.subr.mxu0 0.0
    %193 = vmatpush1.msra.mxu0 0.0
    %194 = vmatprep.subr.mxu0 0.0
    %195 = vmatpush1.msra.mxu0 0.0
    %196 = vmatprep.subr.mxu0 0.0
    %197 = vmatpush1.msra.mxu0 0.0
    %198 = vmatprep.subr.mxu0 0.0
    %199 = vmatpush1.msra.mxu0 0.0
    %200 = vmatprep.subr.mxu0 0.0
    %201 = vmatpush1.msra.mxu0 0.0
    %202 = vmatprep.subr.mxu0 0.0
    %203 = vmatpush1.msra.mxu0 0.0
    %204 = vmatprep.subr.mxu0 0.0
    %205 = vmatpush1.msra.mxu0 0.0
    %206 = vmatprep.subr.mxu0 0.0
    %207 = vmatpush1.msra.mxu0 0.0
    %208 = vmatprep.subr.mxu0 0.0
    %209 = vmatpush1.msra.mxu0 0.0
    %210 = vmatprep.subr.mxu0 0.0
    %211 = vmatpush1.msra.mxu0 0.0
    %212 = vmatprep.subr.mxu0 0.0
    %213 = vmatpush1.msra.mxu0 0.0
    %214 = vmatprep.mubr.f32.mxu0 0.0
    %215 = vmatmul.mubr.f32.gmra.mrb[0].mxu0 %v135
    %v216 = vpop.f32.mrb[0].mxu0
    %v217 = vadd.f32 %v131, %v216
    %v218 = vpop.f32.mrb[0].mxu0
    %219 = vmatprep.mubr.f32.mxu0 0.0
    %220 = vmatmul.mubr.f32.gmra.mrb[0].mxu0 %v138
    %v221 = vpop.f32.mrb[0].mxu0
    %v222 = vadd.f32 %v131, %v221
    %v223 = vpop.f32.mrb[0].mxu0
    %224 = vmatprep.mubr.f32.mxu0 0.0
    %225 = vmatmul.mubr.f32.gmra.mrb[0].mxu0 %v141
    %v226 = vpop.f32.mrb[0].mxu0
    %v227 = vadd.f32 %v131, %v226
    %v228 = vpop.f32.mrb[0].mxu0
    %229 = vmatprep.mubr.f32.mxu0 0.0
    %230 = vmatmul.mubr.f32.gmra.mrb[0].mxu0 %v144
    %v231 = vpop.f32.mrb[0].mxu0
    %v232 = vadd.f32 %v131, %v231
    %v233 = vpop.f32.mrb[0].mxu0
    %234 = vdwg.mxu0
    %v235 = vmax.f32 %v217, 0.0
    %v236 = vmax.f32 %v222, 0.0
    %v237 = vmax.f32 %v227, 0.0
    %v238 = vmax.f32 %v232, 0.0
    %vm243 = vcmask 1041408
    %v244 = vrot.slane %v235, 6
    %v245 = vrot.slane %v236, 6
    %v246 = vsel %vm243, %v244, %v245
    %v247 = vrot.slane %v237, 6
    %v248 = vrot.slane %v238, 6
    %v249 = vsel %vm243, %v247, %v248
    %v256 = vsel %vm243, 0.0, %v244
    %v257 = vsel %vm243, 0.0, %v247
    %v258 = vsel %vm243, %v245, 0.0
    %v259 = vsel %vm243, %v248, 0.0
    %v264 = vrot.slane %v256, 1
    %v265 = vrot.slane %v246, 1
    %v266 = vsel %vm68, %v264, %v265
    %v267 = vrot.slane %v258, 1
    %v268 = vsel %vm68, %v265, %v267
    %v269 = vrot.slane %v257, 1
    %v270 = vrot.slane %v249, 1
    %v271 = vsel %vm68, %v269, %v270
    %v272 = vrot.slane %v259, 1
    %v273 = vsel %vm68, %v270, %v272
    %274 = vrot.lane.b32.xlu0 %v266, 8
    %v275 = vpop.permute.xlu0 %274
    %276 = vrot.lane.b32.xlu0 %v268, 8
    %v277 = vpop.permute.xlu0 %276
    %278 = vrot.lane.b32.xlu0 %v271, 8
    %v279 = vpop.permute.xlu0 %278
    %280 = vrot.lane.b32.xlu0 %v273, 8
    %v281 = vpop.permute.xlu0 %280
    %v286 = vrot.slane %v256, 2
    %v287 = vrot.slane %v246, 2
    %v288 = vsel %vm91, %v286, %v287
    %v289 = vrot.slane %v258, 2
    %v290 = vsel %vm91, %v287, %v289
    %v291 = vrot.slane %v257, 2
    %v292 = vrot.slane %v249, 2
    %v293 = vsel %vm91, %v291, %v292
    %v294 = vrot.slane %v259, 2
    %v295 = vsel %vm91, %v292, %v294
    %296 = vrot.lane.b32.xlu0 %v288, 16
    %v297 = vpop.permute.xlu0 %296
    %298 = vrot.lane.b32.xlu0 %v290, 16
    %v299 = vpop.permute.xlu0 %298
    %300 = vrot.lane.b32.xlu0 %v293, 16
    %v301 = vpop.permute.xlu0 %300
    %302 = vrot.lane.b32.xlu0 %v295, 16
    %v303 = vpop.permute.xlu0 %302
    %vm308 = vcmask 1044480
    %v309 = vrot.slane %v256, 3
    %v310 = vrot.slane %v246, 3
    %v311 = vsel %vm308, %v309, %v310
    %v312 = vrot.slane %v258, 3
    %v313 = vsel %vm308, %v310, %v312
    %v314 = vrot.slane %v257, 3
    %v315 = vrot.slane %v249, 3
    %v316 = vsel %vm308, %v314, %v315
    %v317 = vrot.slane %v259, 3
    %v318 = vsel %vm308, %v315, %v317
    %319 = vrot.lane.b32.xlu0 %v311, 24
    %v320 = vpop.permute.xlu0 %319
    %321 = vrot.lane.b32.xlu0 %v313, 24
    %v322 = vpop.permute.xlu0 %321
    %323 = vrot.lane.b32.xlu0 %v316, 24
    %v324 = vpop.permute.xlu0 %323
    %325 = vrot.lane.b32.xlu0 %v318, 24
    %v326 = vpop.permute.xlu0 %325
    %v331 = vrot.slane %v256, 4
    %v332 = vrot.slane %v246, 4
    %v333 = vsel %vm146, %v331, %v332
    %v334 = vrot.slane %v258, 4
    %v335 = vsel %vm146, %v332, %v334
    %v336 = vrot.slane %v257, 4
    %v337 = vrot.slane %v249, 4
    %v338 = vsel %vm146, %v336, %v337
    %v339 = vrot.slane %v259, 4
    %v340 = vsel %vm146, %v337, %v339
    %341 = vrot.lane.b32.xlu0 %v333, 32
    %v342 = vpop.permute.xlu0 %341
    %343 = vrot.lane.b32.xlu0 %v335, 32
    %v344 = vpop.permute.xlu0 %343
    %345 = vrot.lane.b32.xlu0 %v338, 32
    %v346 = vpop.permute.xlu0 %345
    %347 = vrot.lane.b32.xlu0 %v340, 32
    %v348 = vpop.permute.xlu0 %347
    %v353 = vsel %vm119, %v256, %v275
    %v354 = vsel %vm119, %v246, %v277
    %v355 = vsel %vm119, %v257, %v279
    %v356 = vsel %vm119, %v249, %v281
    %vm357 = vcmask 130048
    %v358 = vsel %vm357, %v353, %v297
    %v359 = vsel %vm357, %v354, %v299
    %v360 = vsel %vm357, %v355, %v301
    %v361 = vsel %vm357, %v356, %v303
    %vm362 = vcmask 195584
    %v363 = vsel %vm362, %v358, %v320
    %v364 = vsel %vm362, %v359, %v322
    %v365 = vsel %vm362, %v360, %v324
    %v366 = vsel %vm362, %v361, %v326
    %vm367 = vcmask 261120
    %v368 = vsel %vm367, %v363, %v342
    %v369 = vsel %vm367, %v364, %v344
    %v370 = vsel %vm367, %v365, %v346
    %v371 = vsel %vm367, %v366, %v348
    %v372 = vld [vmem:[%s3] sm:$0xff]
    %v373 = vld [vmem:[%s3 + $0x8] sm:$0xff]
    %v374 = vld [vmem:[%s3 + $0x10] sm:$0xff]
    %v375 = vld [vmem:[%s3 + $0x18] sm:$0xff]
    %v376 = vld [vmem:[%s3 + $0x20] sm:$0xff]
    %v377 = vld [vmem:[%s4] sm:$0x1]
    %v379 = vlaneseq
    %v380 = vshrl.u32 %v379, 7
    %v381 = vsub.s32 0, %v380
    %v382 = vrot.slane %v377, %v381
    %vm384 = vcmask 326656
    %v386 = vsel %vm384, %v368, 0
    %v389 = vsel %vm384, %v369, 0
    %v392 = vsel %vm384, %v370, 0
    %v395 = vsel %vm384, %v371, 0
    %397 = vmatprep.subr.mxu0 0.0
    %398 = vmatpush1.msra.mxu0 %v372
    %399 = vmatprep.subr.mxu0 0.0
    %400 = vmatpush1.msra.mxu0 %v373
    %401 = vmatprep.subr.mxu0 0.0
    %402 = vmatpush1.msra.mxu0 %v374
    %403 = vmatprep.subr.mxu0 0.0
    %404 = vmatpush1.msra.mxu0 %v375
    %405 = vmatprep.subr.mxu0 0.0
    %406 = vmatpush1.msra.mxu0 %v376
    %407 = vmatprep.subr.mxu0 0.0
    %408 = vmatpush1.msra.mxu0 0.0
    %409 = vmatprep.subr.mxu0 0.0
    %410 = vmatpush1.msra.mxu0 0.0
    %411 = vmatprep.subr.mxu0 0.0
    %412 = vmatpush1.msra.mxu0 0.0
    %413 = vmatprep.subr.mxu0 0.0
    %414 = vmatpush1.msra.mxu0 0.0
    %415 = vmatprep.subr.mxu0 0.0
    %416 = vmatpush1.msra.mxu0 0.0
    %417 = vmatprep.subr.mxu0 0.0
    %418 = vmatpush1.msra.mxu0 0.0
    %419 = vmatprep.subr.mxu0 0.0
    %420 = vmatpush1.msra.mxu0 0.0
    %421 = vmatprep.subr.mxu0 0.0
    %422 = vmatpush1.msra.mxu0 0.0
    %423 = vmatprep.subr.mxu0 0.0
    %424 = vmatpush1.msra.mxu0 0.0
    %425 = vmatprep.subr.mxu0 0.0
    %426 = vmatpush1.msra.mxu0 0.0
    %427 = vmatprep.subr.mxu0 0.0
    %428 = vmatpush1.msra.mxu0 0.0
    %429 = vmatprep.subr.mxu0 0.0
    %430 = vmatpush1.msra.mxu0 0.0
    %431 = vmatprep.subr.mxu0 0.0
    %432 = vmatpush1.msra.mxu0 0.0
    %433 = vmatprep.subr.mxu0 0.0
    %434 = vmatpush1.msra.mxu0 0.0
    %435 = vmatprep.subr.mxu0 0.0
    %436 = vmatpush1.msra.mxu0 0.0
    %437 = vmatprep.subr.mxu0 0.0
    %438 = vmatpush1.msra.mxu0 0.0
    %439 = vmatprep.subr.mxu0 0.0
    %440 = vmatpush1.msra.mxu0 0.0
    %441 = vmatprep.subr.mxu0 0.0
    %442 = vmatpush1.msra.mxu0 0.0
    %443 = vmatprep.subr.mxu0 0.0
    %444 = vmatpush1.msra.mxu0 0.0
    %445 = vmatprep.subr.mxu0 0.0
    %446 = vmatpush1.msra.mxu0 0.0
    %447 = vmatprep.subr.mxu0 0.0
    %448 = vmatpush1.msra.mxu0 0.0
    %449 = vmatprep.subr.mxu0 0.0
    %450 = vmatpush1.msra.mxu0 0.0
    %451 = vmatprep.subr.mxu0 0.0
    %452 = vmatpush1.msra.mxu0 0.0
    %453 = vmatprep.subr.mxu0 0.0
    %454 = vmatpush1.msra.mxu0 0.0
    %455 = vmatprep.subr.mxu0 0.0
    %456 = vmatpush1.msra.mxu0 0.0
    %457 = vmatprep.subr.mxu0 0.0
    %458 = vmatpush1.msra.mxu0 0.0
    %459 = vmatprep.subr.mxu0 0.0
    %460 = vmatpush1.msra.mxu0 0.0
    %461 = vmatprep.mubr.f32.mxu0 0.0
    %462 = vmatmul.mubr.f32.gmra.mrb[0].mxu0 %v386
    %v463 = vpop.f32.mrb[0].mxu0
    %v464 = vadd.f32 %v382, %v463
    %v465 = vpop.f32.mrb[0].mxu0
    %466 = vmatprep.mubr.f32.mxu0 0.0
    %467 = vmatmul.mubr.f32.gmra.mrb[0].mxu0 %v389
    %v468 = vpop.f32.mrb[0].mxu0
    %v469 = vadd.f32 %v382, %v468
    %v470 = vpop.f32.mrb[0].mxu0
    %471 = vmatprep.mubr.f32.mxu0 0.0
    %472 = vmatmul.mubr.f32.gmra.mrb[0].mxu0 %v392
    %v473 = vpop.f32.mrb[0].mxu0
    %v474 = vadd.f32 %v382, %v473
    %v475 = vpop.f32.mrb[0].mxu0
    %476 = vmatprep.mubr.f32.mxu0 0.0
    %477 = vmatmul.mubr.f32.gmra.mrb[0].mxu0 %v395
    %v478 = vpop.f32.mrb[0].mxu0
    %v479 = vadd.f32 %v382, %v478
    %v480 = vpop.f32.mrb[0].mxu0
    %481 = vdwg.mxu0
    %v482 = vmax.f32 %v464, 0.0
    %v483 = vmax.f32 %v469, 0.0
    %v484 = vmax.f32 %v474, 0.0
    %v485 = vmax.f32 %v479, 0.0
    %v488 = vrot.slane %v482, 1
    %v489 = vrot.slane %v484, 1
    %490 = vrot.lane.b32.xlu0 %v488, 8
    %v491 = vpop.permute.xlu0 %490
    %492 = vrot.lane.b32.xlu0 %v489, 8
    %v493 = vpop.permute.xlu0 %492
    %v496 = vrot.slane %v482, 2
    %v497 = vrot.slane %v484, 2
    %498 = vrot.lane.b32.xlu0 %v496, 16
    %v499 = vpop.permute.xlu0 %498
    %500 = vrot.lane.b32.xlu0 %v497, 16
    %v501 = vpop.permute.xlu0 %500
    %v504 = vrot.slane %v482, 3
    %v505 = vrot.slane %v484, 3
    %506 = vrot.lane.b32.xlu0 %v504, 24
    %v507 = vpop.permute.xlu0 %506
    %508 = vrot.lane.b32.xlu0 %v505, 24
    %v509 = vpop.permute.xlu0 %508
    %v512 = vrot.slane %v482, 4
    %v513 = vrot.slane %v484, 4
    %514 = vrot.lane.b32.xlu0 %v512, 32
    %v515 = vpop.permute.xlu0 %514
    %516 = vrot.lane.b32.xlu0 %v513, 32
    %v517 = vpop.permute.xlu0 %516
    %v520 = vrot.slane %v482, 5
    %v521 = vrot.slane %v484, 5
    %522 = vrot.lane.b32.xlu0 %v520, 40
    %v523 = vpop.permute.xlu0 %522
    %524 = vrot.lane.b32.xlu0 %v521, 40
    %v525 = vpop.permute.xlu0 %524
    %v528 = vrot.slane %v482, 6
    %v529 = vrot.slane %v484, 6
    %530 = vrot.lane.b32.xlu0 %v528, 48
    %v531 = vpop.permute.xlu0 %530
    %532 = vrot.lane.b32.xlu0 %v529, 48
    %v533 = vpop.permute.xlu0 %532
    %v536 = vrot.slane %v482, 7
    %v537 = vrot.slane %v484, 7
    %538 = vrot.lane.b32.xlu0 %v536, 56
    %v539 = vpop.permute.xlu0 %538
    %540 = vrot.lane.b32.xlu0 %v537, 56
    %v541 = vpop.permute.xlu0 %540
    %546 = vrot.lane.b32.xlu0 %v483, 64
    %v547 = vpop.permute.xlu0 %546
    %548 = vrot.lane.b32.xlu0 %v485, 64
    %v549 = vpop.permute.xlu0 %548
    %v552 = vrot.slane %v483, 1
    %v553 = vrot.slane %v485, 1
    %554 = vrot.lane.b32.xlu0 %v552, 72
    %v555 = vpop.permute.xlu0 %554
    %556 = vrot.lane.b32.xlu0 %v553, 72
    %v557 = vpop.permute.xlu0 %556
    %v560 = vrot.slane %v483, 2
    %v561 = vrot.slane %v485, 2
    %562 = vrot.lane.b32.xlu0 %v560, 80
    %v563 = vpop.permute.xlu0 %562
    %564 = vrot.lane.b32.xlu0 %v561, 80
    %v565 = vpop.permute.xlu0 %564
    %v568 = vrot.slane %v483, 3
    %v569 = vrot.slane %v485, 3
    %570 = vrot.lane.b32.xlu0 %v568, 88
    %v571 = vpop.permute.xlu0 %570
    %572 = vrot.lane.b32.xlu0 %v569, 88
    %v573 = vpop.permute.xlu0 %572
    %v576 = vrot.slane %v483, 4
    %v577 = vrot.slane %v485, 4
    %578 = vrot.lane.b32.xlu0 %v576, 96
    %v579 = vpop.permute.xlu0 %578
    %580 = vrot.lane.b32.xlu0 %v577, 96
    %v581 = vpop.permute.xlu0 %580
    %v584 = vrot.slane %v483, 5
    %v585 = vrot.slane %v485, 5
    %586 = vrot.lane.b32.xlu0 %v584, 104
    %v587 = vpop.permute.xlu0 %586
    %588 = vrot.lane.b32.xlu0 %v585, 104
    %v589 = vpop.permute.xlu0 %588
    %v592 = vrot.slane %v483, 6
    %v593 = vrot.slane %v485, 6
    %594 = vrot.lane.b32.xlu0 %v592, 112
    %v595 = vpop.permute.xlu0 %594
    %596 = vrot.lane.b32.xlu0 %v593, 112
    %v597 = vpop.permute.xlu0 %596
    %v600 = vrot.slane %v483, 7
    %v601 = vrot.slane %v485, 7
    %602 = vrot.lane.b32.xlu0 %v600, 120
    %v603 = vpop.permute.xlu0 %602
    %604 = vrot.lane.b32.xlu0 %v601, 120
    %v605 = vpop.permute.xlu0 %604
    %v608 = vsel %vm119, %v482, %v491
    %v609 = vsel %vm119, %v484, %v493
    %v610 = vsel %vm357, %v608, %v499
    %v611 = vsel %vm357, %v609, %v501
    %v612 = vsel %vm362, %v610, %v507
    %v613 = vsel %vm362, %v611, %v509
    %v614 = vsel %vm367, %v612, %v515
    %v615 = vsel %vm367, %v613, %v517
    %v616 = vsel %vm384, %v614, %v523
    %v617 = vsel %vm384, %v615, %v525
    %vm618 = vcmask 392192
    %v619 = vsel %vm618, %v616, %v531
    %v620 = vsel %vm618, %v617, %v533
    %vm621 = vcmask 457728
    %v622 = vsel %vm621, %v619, %v539
    %v623 = vsel %vm621, %v620, %v541
    %vm624 = vcmask 523264
    %v625 = vsel %vm624, %v622, %v547
    %v626 = vsel %vm624, %v623, %v549
    %vm627 = vcmask 588800
    %v628 = vsel %vm627, %v625, %v555
    %v629 = vsel %vm627, %v626, %v557
    %vm630 = vcmask 654336
    %v631 = vsel %vm630, %v628, %v563
    %v632 = vsel %vm630, %v629, %v565
    %vm633 = vcmask 719872
    %v634 = vsel %vm633, %v631, %v571
    %v635 = vsel %vm633, %v632, %v573
    %vm636 = vcmask 785408
    %v637 = vsel %vm636, %v634, %v579
    %v638 = vsel %vm636, %v635, %v581
    %vm639 = vcmask 850944
    %v640 = vsel %vm639, %v637, %v587
    %v641 = vsel %vm639, %v638, %v589
    %vm642 = vcmask 916480
    %v643 = vsel %vm642, %v640, %v595
    %v644 = vsel %vm642, %v641, %v597
    %vm645 = vcmask 982016
    %v646 = vsel %vm645, %v643, %v603
    %v647 = vsel %vm645, %v644, %v605
    %v648 = vld [vmem:[%s5] sm:$0xff]
    %v649 = vld [vmem:[%s5 + $0x8] sm:$0xff]
    %v650 = vld [vmem:[%s5 + $0x10] sm:$0xff]
    %v651 = vld [vmem:[%s5 + $0x18] sm:$0xff]
    %v652 = vld [vmem:[%s5 + $0x20] sm:$0xff]
    %v653 = vld [vmem:[%s5 + $0x28] sm:$0xff]
    %v654 = vld [vmem:[%s5 + $0x30] sm:$0xff]
    %v655 = vld [vmem:[%s5 + $0x38] sm:$0xff]
    %v656 = vld [vmem:[%s5 + $0x40] sm:$0xff]
    %v657 = vld [vmem:[%s5 + $0x48] sm:$0xff]
    %v658 = vld [vmem:[%s5 + $0x50] sm:$0xff]
    %v659 = vld [vmem:[%s5 + $0x58] sm:$0xff]
    %v660 = vld [vmem:[%s5 + $0x60] sm:$0xff]
    %v661 = vld [vmem:[%s5 + $0x68] sm:$0xff]
    %v662 = vld [vmem:[%s5 + $0x70] sm:$0xff]
    %v663 = vld [vmem:[%s5 + $0x78] sm:$0xff]
    %v664 = vld [vmem:[%s6] sm:$0x1]
    %v666 = vlaneseq
    %v667 = vshrl.u32 %v666, 7
    %v668 = vsub.s32 0, %v667
    %v669 = vrot.slane %v664, %v668
    %v673 = vrot.slane %v647, 7
    %vm674 = vcmask 1041409
    %v675 = vsel %vm674, %v673, %v646
    %677 = vmatprep.subr.mxu0 0.0
    %678 = vmatpush1.msra.mxu0 %v648
    %679 = vmatprep.subr.mxu0 0.0
    %680 = vmatpush1.msra.mxu0 %v649
    %681 = vmatprep.subr.mxu0 0.0
    %682 = vmatpush1.msra.mxu0 %v650
    %683 = vmatprep.subr.mxu0 0.0
    %684 = vmatpush1.msra.mxu0 %v651
    %685 = vmatprep.subr.mxu0 0.0
    %686 = vmatpush1.msra.mxu0 %v652
    %687 = vmatprep.subr.mxu0 0.0
    %688 = vmatpush1.msra.mxu0 %v653
    %689 = vmatprep.subr.mxu0 0.0
    %690 = vmatpush1.msra.mxu0 %v654
    %691 = vmatprep.subr.mxu0 0.0
    %692 = vmatpush1.msra.mxu0 %v655
    %693 = vmatprep.subr.mxu0 0.0
    %694 = vmatpush1.msra.mxu0 %v656
    %695 = vmatprep.subr.mxu0 0.0
    %696 = vmatpush1.msra.mxu0 %v657
    %697 = vmatprep.subr.mxu0 0.0
    %698 = vmatpush1.msra.mxu0 %v658
    %699 = vmatprep.subr.mxu0 0.0
    %700 = vmatpush1.msra.mxu0 %v659
    %701 = vmatprep.subr.mxu0 0.0
    %702 = vmatpush1.msra.mxu0 %v660
    %703 = vmatprep.subr.mxu0 0.0
    %704 = vmatpush1.msra.mxu0 %v661
    %705 = vmatprep.subr.mxu0 0.0
    %706 = vmatpush1.msra.mxu0 %v662
    %707 = vmatprep.subr.mxu0 0.0
    %708 = vmatpush1.msra.mxu0 %v663
    %709 = vmatprep.subr.mxu0 0.0
    %710 = vmatpush1.msra.mxu0 0.0
    %711 = vmatprep.subr.mxu0 0.0
    %712 = vmatpush1.msra.mxu0 0.0
    %713 = vmatprep.subr.mxu0 0.0
    %714 = vmatpush1.msra.mxu0 0.0
    %715 = vmatprep.subr.mxu0 0.0
    %716 = vmatpush1.msra.mxu0 0.0
    %717 = vmatprep.subr.mxu0 0.0
    %718 = vmatpush1.msra.mxu0 0.0
    %719 = vmatprep.subr.mxu0 0.0
    %720 = vmatpush1.msra.mxu0 0.0
    %721 = vmatprep.subr.mxu0 0.0
    %722 = vmatpush1.msra.mxu0 0.0
    %723 = vmatprep.subr.mxu0 0.0
    %724 = vmatpush1.msra.mxu0 0.0
    %725 = vmatprep.subr.mxu0 0.0
    %726 = vmatpush1.msra.mxu0 0.0
    %727 = vmatprep.subr.mxu0 0.0
    %728 = vmatpush1.msra.mxu0 0.0
    %729 = vmatprep.subr.mxu0 0.0
    %730 = vmatpush1.msra.mxu0 0.0
    %731 = vmatprep.subr.mxu0 0.0
    %732 = vmatpush1.msra.mxu0 0.0
    %733 = vmatprep.subr.mxu0 0.0
    %734 = vmatpush1.msra.mxu0 0.0
    %735 = vmatprep.subr.mxu0 0.0
    %736 = vmatpush1.msra.mxu0 0.0
    %737 = vmatprep.subr.mxu0 0.0
    %738 = vmatpush1.msra.mxu0 0.0
    %739 = vmatprep.subr.mxu0 0.0
    %740 = vmatpush1.msra.mxu0 0.0
    %741 = vmatprep.mubr.f32.mxu0 0.0
    %742 = vmatmul.mubr.f32.gmra.mrb[0].mxu0 %v675
    %v743 = vpop.f32.mrb[0].mxu0
    %v744 = vadd.f32 %v669, %v743
    %v745 = vpop.f32.mrb[0].mxu0
    %746 = vdwg.mxu0
    %v747 = vmax.f32 %v744, 0.0
    %v748 = vld [vmem:[%s7] sm:$0xff]
    %v749 = vld [vmem:[%s7 + $0x8] sm:$0xff]
    %v750 = vld [vmem:[%s7 + $0x10] sm:$0xff]
    %v751 = vld [vmem:[%s7 + $0x18] sm:$0xff]
    %v752 = vld [vmem:[%s8] sm:$0x1]
    %v754 = vlaneseq
    %v755 = vshrl.u32 %v754, 7
    %v756 = vsub.s32 0, %v755
    %v757 = vrot.slane %v752, %v756
    %v760 = vsel %vm367, %v747, 0
    %762 = vmatprep.subr.mxu0 0.0
    %763 = vmatpush1.msra.mxu0 %v748
    %764 = vmatprep.subr.mxu0 0.0
    %765 = vmatpush1.msra.mxu0 %v749
    %766 = vmatprep.subr.mxu0 0.0
    %767 = vmatpush1.msra.mxu0 %v750
    %768 = vmatprep.subr.mxu0 0.0
    %769 = vmatpush1.msra.mxu0 %v751
    %770 = vmatprep.subr.mxu0 0.0
    %771 = vmatpush1.msra.mxu0 0.0
    %772 = vmatprep.subr.mxu0 0.0
    %773 = vmatpush1.msra.mxu0 0.0
    %774 = vmatprep.subr.mxu0 0.0
    %775 = vmatpush1.msra.mxu0 0.0
    %776 = vmatprep.subr.mxu0 0.0
    %777 = vmatpush1.msra.mxu0 0.0
    %778 = vmatprep.subr.mxu0 0.0
    %779 = vmatpush1.msra.mxu0 0.0
    %780 = vmatprep.subr.mxu0 0.0
    %781 = vmatpush1.msra.mxu0 0.0
    %782 = vmatprep.subr.mxu0 0.0
    %783 = vmatpush1.msra.mxu0 0.0
    %784 = vmatprep.subr.mxu0 0.0
    %785 = vmatpush1.msra.mxu0 0.0
    %786 = vmatprep.subr.mxu0 0.0
    %787 = vmatpush1.msra.mxu0 0.0
    %788 = vmatprep.subr.mxu0 0.0
    %789 = vmatpush1.msra.mxu0 0.0
    %790 = vmatprep.subr.mxu0 0.0
    %791 = vmatpush1.msra.mxu0 0.0
    %792 = vmatprep.subr.mxu0 0.0
    %793 = vmatpush1.msra.mxu0 0.0
    %794 = vmatprep.subr.mxu0 0.0
    %795 = vmatpush1.msra.mxu0 0.0
    %796 = vmatprep.subr.mxu0 0.0
    %797 = vmatpush1.msra.mxu0 0.0
    %798 = vmatprep.subr.mxu0 0.0
    %799 = vmatpush1.msra.mxu0 0.0
    %800 = vmatprep.subr.mxu0 0.0
    %801 = vmatpush1.msra.mxu0 0.0
    %802 = vmatprep.subr.mxu0 0.0
    %803 = vmatpush1.msra.mxu0 0.0
    %804 = vmatprep.subr.mxu0 0.0
    %805 = vmatpush1.msra.mxu0 0.0
    %806 = vmatprep.subr.mxu0 0.0
    %807 = vmatpush1.msra.mxu0 0.0
    %808 = vmatprep.subr.mxu0 0.0
    %809 = vmatpush1.msra.mxu0 0.0
    %810 = vmatprep.subr.mxu0 0.0
    %811 = vmatpush1.msra.mxu0 0.0
    %812 = vmatprep.subr.mxu0 0.0
    %813 = vmatpush1.msra.mxu0 0.0
    %814 = vmatprep.subr.mxu0 0.0
    %815 = vmatpush1.msra.mxu0 0.0
    %816 = vmatprep.subr.mxu0 0.0
    %817 = vmatpush1.msra.mxu0 0.0
    %818 = vmatprep.subr.mxu0 0.0
    %819 = vmatpush1.msra.mxu0 0.0
    %820 = vmatprep.subr.mxu0 0.0
    %821 = vmatpush1.msra.mxu0 0.0
    %822 = vmatprep.subr.mxu0 0.0
    %823 = vmatpush1.msra.mxu0 0.0
    %824 = vmatprep.subr.mxu0 0.0
    %825 = vmatpush1.msra.mxu0 0.0
    %826 = vmatprep.mubr.f32.mxu0 0.0
    %827 = vmatmul.mubr.f32.gmra.mrb[0].mxu0 %v760
    %v828 = vpop.f32.mrb[0].mxu0
    %v829 = vadd.f32 %v757, %v828
    %v830 = vpop.f32.mrb[0].mxu0
    %831 = vdwg.mxu0
    %v832 = vmax.f32 %v829, 0.0
    %v833 = vld [vmem:[%s9] sm:$0xff]
    %v834 = vld [vmem:[%s9 + $0x8] sm:$0xff]
    %v835 = vld [vmem:[%s10] sm:$0x1]
    %v837 = vlaneseq
    %v838 = vshrl.u32 %v837, 7
    %v839 = vsub.s32 0, %v838
    %v840 = vrot.slane %v835, %v839
    %v843 = vsel %vm357, %v832, 0
    %845 = vmatprep.subr.mxu0 0.0
    %846 = vmatpush1.msra.mxu0 %v833
    %847 = vmatprep.subr.mxu0 0.0
    %848 = vmatpush1.msra.mxu0 %v834
    %849 = vmatprep.subr.mxu0 0.0
    %850 = vmatpush1.msra.mxu0 0.0
    %851 = vmatprep.subr.mxu0 0.0
    %852 = vmatpush1.msra.mxu0 0.0
    %853 = vmatprep.subr.mxu0 0.0
    %854 = vmatpush1.msra.mxu0 0.0
    %855 = vmatprep.subr.mxu0 0.0
    %856 = vmatpush1.msra.mxu0 0.0
    %857 = vmatprep.subr.mxu0 0.0
    %858 = vmatpush1.msra.mxu0 0.0
    %859 = vmatprep.subr.mxu0 0.0
    %860 = vmatpush1.msra.mxu0 0.0
    %861 = vmatprep.subr.mxu0 0.0
    %862 = vmatpush1.msra.mxu0 0.0
    %863 = vmatprep.subr.mxu0 0.0
    %864 = vmatpush1.msra.mxu0 0.0
    %865 = vmatprep.subr.mxu0 0.0
    %866 = vmatpush1.msra.mxu0 0.0
    %867 = vmatprep.subr.mxu0 0.0
    %868 = vmatpush1.msra.mxu0 0.0
    %869 = vmatprep.subr.mxu0 0.0
    %870 = vmatpush1.msra.mxu0 0.0
    %871 = vmatprep.subr.mxu0 0.0
    %872 = vmatpush1.msra.mxu0 0.0
    %873 = vmatprep.subr.mxu0 0.0
    %874 = vmatpush1.msra.mxu0 0.0
    %875 = vmatprep.subr.mxu0 0.0
    %876 = vmatpush1.msra.mxu0 0.0
    %877 = vmatprep.subr.mxu0 0.0
    %878 = vmatpush1.msra.mxu0 0.0
    %879 = vmatprep.subr.mxu0 0.0
    %880 = vmatpush1.msra.mxu0 0.0
    %881 = vmatprep.subr.mxu0 0.0
    %882 = vmatpush1.msra.mxu0 0.0
    %883 = vmatprep.subr.mxu0 0.0
    %884 = vmatpush1.msra.mxu0 0.0
    %885 = vmatprep.subr.mxu0 0.0
    %886 = vmatpush1.msra.mxu0 0.0
    %887 = vmatprep.subr.mxu0 0.0
    %888 = vmatpush1.msra.mxu0 0.0
    %889 = vmatprep.subr.mxu0 0.0
    %890 = vmatpush1.msra.mxu0 0.0
    %891 = vmatprep.subr.mxu0 0.0
    %892 = vmatpush1.msra.mxu0 0.0
    %893 = vmatprep.subr.mxu0 0.0
    %894 = vmatpush1.msra.mxu0 0.0
    %895 = vmatprep.subr.mxu0 0.0
    %896 = vmatpush1.msra.mxu0 0.0
    %897 = vmatprep.subr.mxu0 0.0
    %898 = vmatpush1.msra.mxu0 0.0
    %899 = vmatprep.subr.mxu0 0.0
    %900 = vmatpush1.msra.mxu0 0.0
    %901 = vmatprep.subr.mxu0 0.0
    %902 = vmatpush1.msra.mxu0 0.0
    %903 = vmatprep.subr.mxu0 0.0
    %904 = vmatpush1.msra.mxu0 0.0
    %905 = vmatprep.subr.mxu0 0.0
    %906 = vmatpush1.msra.mxu0 0.0
    %907 = vmatprep.subr.mxu0 0.0
    %908 = vmatpush1.msra.mxu0 0.0
    %909 = vmatprep.mubr.f32.mxu0 0.0
    %910 = vmatmul.mubr.f32.gmra.mrb[0].mxu0 %v843
    %v911 = vpop.f32.mrb[0].mxu0
    %v912 = vadd.f32 %v840, %v911
    %v913 = vpop.f32.mrb[0].mxu0
    %914 = vdwg.mxu0
    %vm915 = vcmask 25600
    %916 = vst.msk [vmem:[#allocation2] sm:$0x3] %vm915, %v912
    // Predicated region
    $region46: #{tpu_custom_call.1} parent=1 // pred_check
      _
    $region47: #{tpu_custom_call.1} parent=1 // pred_check_branch
      %918 = sbr.rel (0) target = $region49
    $region48: #{tpu_custom_call.1} parent=1 // pred_region
      %s920 = ssub.s32 32, 32
      %921 = vsyncadd [#allocation3], %s920
      %s923 = sshll.u32 [#allocation2], 4
      %s924 = int_to_ptr.vmem [resolvable:$true] %s923
      %926 = dma.vmem_to_hbm [thread:$0]  %s924, 32, %s11, [#allocation3]
    $region49: #{tpu_custom_call.1} parent=1 // pred_fallthru
      _
    // Predicated region
    $region50: #{tpu_custom_call.1} parent=1 // pred_check
      _
    $region51: #{tpu_custom_call.1} parent=1 // pred_check_branch
      %928 = sbr.rel (0) target = $region53
    $region52: #{tpu_custom_call.1} parent=1 // pred_region
      %929 = dma.done [#allocation3], 32
    $region53: #{tpu_custom_call.1} parent=1 // pred_fallthru
      _
    %930 = vsyncpa [#allocation3], 1

</llo_original>
